<compile_context>
chip_gen: v7x
topology: tpu7x:2x2x1
jax: 0.10.0
libtpu: 0.0.40
codegen_flags: <defaults>
</compile_context>

<pallas_src>
import functools

import jax
import jax.numpy as jnp
from jax import lax
from jax.experimental import pallas as pl
from jax.experimental.pallas import tpu as pltpu


def _linear_bias_kernel(x_ref, w_ref, b_ref, o_ref, *, mxu_bf16):
    """One M tile of y = x @ W.T + b.

    x_ref : (bm, K)   activation tile streamed over the grid (K = 768 on lanes)
    w_ref : (Np, K)   full weight, resident in VMEM (grid-invariant index_map)
    b_ref : (1, Np)   bias row, broadcast-added on the VPU
    o_ref : (bm, Np)  lane-dense output tile (Np is a multiple of 128)
    """
    x = x_ref[...]
    w = w_ref[...]
    if mxu_bf16:
        # v5e: cuts MXU passes 2-4x while keeping f32 accumulation; neutral on v6e/v7x.
        x = x.astype(jnp.bfloat16)
        w = w.astype(jnp.bfloat16)
    acc = lax.dot_general(
        x, w,
        dimension_numbers=(((1,), (1,)), ((), ())),   # contract K of x with K of w
        preferred_element_type=jnp.float32,
    )
    o_ref[...] = (acc + b_ref[...]).astype(o_ref.dtype)


def value_net_forward(x, w, b, *, block_m=512, mxu_bf16=False, vmem_limit_bytes=None):
    """Pallas forward of value_net.

    x: (..., 768) f32 (bf16 also accepted), w: (N, 768), b: (N,)  ->  (..., N)
    """
    lead = x.shape[:-1]
    K = x.shape[-1]
    N = w.shape[0]

    # Flatten any leading dims into the matmul M axis (nn.Linear acts on the last dim).
    x2 = x.reshape(-1, K)
    M = x2.shape[0]

    # Lane-dense output width: pad N up to the next multiple of 128 (zero rows of W, zero bias)
    # so the out_spec never emits masked partial stores; slice the padding off afterwards.
    Np = max(128, ((N + 127) // 128) * 128)
    w2 = w if Np == N else jnp.pad(w, ((0, Np - N), (0, 0)))
    b2 = (b if Np == N else jnp.pad(b, ((0, Np - N),))).reshape(1, Np)

    # M tile: large tiles amortize the ~0.35 us/step grid overhead and reach the HBM roofline.
    # No padding of x over M — grid uses cdiv and Pallas handles the partial last block
    # (writeback of the output tile is clipped to the real M extent).
    bm = min(block_m, M)
    grid = (pl.cdiv(M, bm),)

    itemsize = jnp.dtype(x2.dtype).itemsize
    cost = pl.CostEstimate(
        flops=2 * M * K * Np,
        transcendentals=0,
        bytes_accessed=(M * K * itemsize
                        + Np * K * jnp.dtype(w2.dtype).itemsize
                        + Np * jnp.dtype(b2.dtype).itemsize
                        + M * Np * 4),
    )

    out = pl.pallas_call(
        functools.partial(_linear_bias_kernel, mxu_bf16=mxu_bf16),
        out_shape=jax.ShapeDtypeStruct((M, Np), jnp.float32),
        grid=grid,
        in_specs=[
            pl.BlockSpec((bm, K), lambda i: (i, 0)),    # activation tiles stream over M
            pl.BlockSpec((Np, K), lambda i: (0, 0)),    # full weight, same block every step
            pl.BlockSpec((1, Np), lambda i: (0, 0)),    # bias row, resident
        ],
        out_specs=pl.BlockSpec((bm, Np), lambda i: (i, 0)),
        compiler_params=pltpu.CompilerParams(
            dimension_semantics=("parallel",),          # M shards across v7x's 2 TensorCores
            vmem_limit_bytes=vmem_limit_bytes,          # set ~24-32 MiB on v5e if block_m > 1024
        ),
        cost_estimate=cost,
    )(x2, w2, b2)

    if Np != N:
        out = out[:, :N]
    return out.reshape(*lead, N)


if __name__ == "__main__":
    BLACK_WINDOW_SIZE = 126                  # see TODO(synk) above
    IN_FEATURES = 768
    OUT_FEATURES = BLACK_WINDOW_SIZE + 2     # = 128 (lane-dense output width)

    key = jax.random.PRNGKey(0)
    kx, kw, kb = jax.random.split(key, 3)

    B = 2
    x = jax.random.normal(kx, (B, IN_FEATURES), jnp.float32)
    w = jax.random.normal(kw, (OUT_FEATURES, IN_FEATURES), jnp.float32) / jnp.sqrt(IN_FEATURES)
    b = 0.1 * jax.random.normal(kb, (OUT_FEATURES,), jnp.float32)

    out = jax.block_until_ready(value_net_forward(x, w, b))

    # Pure-JAX (XLA) reference of the same forward.
    ref = jax.block_until_ready(x @ w.T + b)

    assert out.shape == ref.shape == (B, OUT_FEATURES), (out.shape, ref.shape)
    max_err = float(jnp.max(jnp.abs(out - ref)))
    if max_err > 1e-3:
        raise AssertionError(f"mismatch vs reference, max abs err = {max_err}")
    print("KERNEL_OK")
</pallas_src>

<mosaic_0001>
module attributes {stable_mosaic.version = 11 : i64} {
  func.func @_linear_bias_kernel(%arg0: i32, %arg1: memref<2x768xf32, #tpu.memory_space<vmem>>, %arg2: memref<128x768xf32, #tpu.memory_space<vmem>>, %arg3: memref<1x128xf32, #tpu.memory_space<vmem>>, %arg4: memref<2x128xf32, #tpu.memory_space<vmem>>) attributes {dimension_semantics = [#tpu.dimension_semantics<parallel>], iteration_bounds = array<i64: 1>, scalar_prefetch = 0 : i64, scratch_operands = 0 : i64, tpu.core_type = #tpu.core_type<tc>, window_params = [{transform_indices = @transform_0, window_bounds = array<i64: 2, 768>}, {pipeline_mode = #tpu.pipeline_mode<synchronous>, transform_indices = @transform_1, window_bounds = array<i64: 128, 768>}, {pipeline_mode = #tpu.pipeline_mode<synchronous>, transform_indices = @transform_2, window_bounds = array<i64: 1, 128>}, {transform_indices = @transform_3, window_bounds = array<i64: 2, 128>}]} {
    %c0 = arith.constant 0 : index
    %c0_0 = arith.constant 0 : index
    %0 = vector.load %arg1[%c0, %c0_0] : memref<2x768xf32, #tpu.memory_space<vmem>>, vector<2x768xf32>
    %c0_1 = arith.constant 0 : index
    %c0_2 = arith.constant 0 : index
    %1 = vector.load %arg2[%c0_1, %c0_2] : memref<128x768xf32, #tpu.memory_space<vmem>>, vector<128x768xf32>
    %cst = arith.constant dense<0.000000e+00> : vector<2x128xf32>
    %2 = tpu.matmul %0, %1, %cst {dimension_numbers = #tpu.dot_dimension_numbers<[1], [1], [0], [0], [0, 0, 1, 0], [], []>} : vector<2x768xf32>, vector<128x768xf32>, vector<2x128xf32> -> vector<2x128xf32>
    %c0_3 = arith.constant 0 : index
    %c0_4 = arith.constant 0 : index
    %3 = vector.load %arg3[%c0_3, %c0_4] : memref<1x128xf32, #tpu.memory_space<vmem>>, vector<1x128xf32>
    %4 = vector.broadcast %3 : vector<1x128xf32> to vector<2x128xf32>
    %5 = arith.addf %2, %4 : vector<2x128xf32>
    %c0_5 = arith.constant 0 : index
    %c0_6 = arith.constant 0 : index
    %6 = vector.load %arg4[%c0_5, %c0_6] : memref<2x128xf32, #tpu.memory_space<vmem>>, vector<2x128xf32>
    tpu.vector_store %arg4[%c0_5, %c0_6], %5 {strides = array<i32>} : memref<2x128xf32, #tpu.memory_space<vmem>>, vector<2x128xf32>,
    return
  }
  func.func @transform_0(%arg0: i32) -> (i32, i32) {
    %c0_i32 = arith.constant 0 : i32
    %c0_i32_0 = arith.constant 0 : i32
    return %arg0, %c0_i32 : i32, i32
  }
  func.func @transform_1(%arg0: i32) -> (i32, i32) {
    %c0_i32 = arith.constant 0 : i32
    %c0_i32_0 = arith.constant 0 : i32
    %c0_i32_1 = arith.constant 0 : i32
    return %c0_i32, %c0_i32_0 : i32, i32
  }
  func.func @transform_2(%arg0: i32) -> (i32, i32) {
    %c0_i32 = arith.constant 0 : i32
    %c0_i32_0 = arith.constant 0 : i32
    %c0_i32_1 = arith.constant 0 : i32
    return %c0_i32, %c0_i32_0 : i32, i32
  }
  func.func @transform_3(%arg0: i32) -> (i32, i32) {
    %c0_i32 = arith.constant 0 : i32
    %c0_i32_0 = arith.constant 0 : i32
    return %arg0, %c0_i32 : i32, i32
  }
}

</mosaic_0001>

<llo_original>
// kernel: tpu_custom_call.1
$region0: #{tpu_custom_call.1}
  #allocation0 [shape = 'u32[]', space=smem, size = 0x4, offset = 0x4, fixed_abs, tag = 'smem constant byte address 0x4 - core index']
  #allocation1 [shape = 'u32[144,128]{1,0:T(1,128)}', space=vmem, size = 0x12000, scoped, tag = 'internal scratch']
  %s0 = inlined_call_operand.hbm [shape: f32[2,768], index: 0, kind: input, shape index: {}]
  %s1 = inlined_call_operand.hbm [shape: f32[128,768], index: 1, kind: input, shape index: {}]
  %s2 = inlined_call_operand.vmem [shape: f32[1,128], index: 2, kind: input, shape index: {}]
  %s3 = inlined_call_operand.hbm [shape: f32[2,128], index: 3, kind: output, shape index: {}]
  %s4 = sld [smem:[#allocation0]]
  $region30: #{tpu_custom_call.1} parent=0
    _
  %s6 = ssub.s32 1, %s4
  %s7 = scalar_select 0, %s6, %s4
  $region1: #{tpu_custom_call.1} parent=0
    #allocation2 [shape = 'u8[6144]{0}', space=vmem, size = 0x1800, scoped, tag = 'input window, operand 0, single buffered']
    #allocation3 [shape = 's32[1]{0}', space=sflag, size = 0x4, scoped, tag = 'scoped memory for tpu_custom_call.1']
    #allocation4 [shape = 's32[1]{0}', space=sflag, size = 0x4, scoped, tag = 'scoped memory for tpu_custom_call.1']
    #allocation5 [shape = 'u8[393216]{0}', space=vmem, size = 0x60000, scoped, tag = 'input window, operand 1, single buffered']
    #allocation6 [shape = 's32[1]{0}', space=sflag, size = 0x4, scoped, tag = 'scoped memory for tpu_custom_call.1']
    #allocation7 [shape = 'u8[1024]{0}', space=vmem, size = 0x400, scoped, tag = 'output window, operand 0, single buffered']
    %8 = vsyncpa [#allocation3], 0
    %9 = vsyncpa [#allocation6], 0
    %10 = vsyncpa [#allocation4], 0
    // Predicated region
    $region2: #{tpu_custom_call.1} parent=1 // pred_check
      _
    $region3: #{tpu_custom_call.1} parent=1 // pred_check_branch
      %12 = sbr.rel (0) target = $region5
    $region4: #{tpu_custom_call.1} parent=1 // pred_region
      %s14 = ssub.s32 192, 192
      %15 = vsyncadd [#allocation3], %s14
      %s17 = sshll.u32 [#allocation2], 4
      %s18 = int_to_ptr.vmem [resolvable:$true] %s17
      %20 = dma.hbm_to_vmem [thread:$0]  %s0, 192, %s18, [#allocation3]
    $region5: #{tpu_custom_call.1} parent=1 // pred_fallthru
      _
    // Predicated region
    $region6: #{tpu_custom_call.1} parent=1 // pred_check
      _
    $region7: #{tpu_custom_call.1} parent=1 // pred_check_branch
      %22 = sbr.rel (0) target = $region9
    $region8: #{tpu_custom_call.1} parent=1 // pred_region
      %s24 = ssub.s32 12288, 12288
      %25 = vsyncadd [#allocation6], %s24
      %s26 = sshll.u32 [#allocation5], 4
      %s27 = int_to_ptr.vmem [resolvable:$true] %s26
      %32 = dma.hbm_to_vmem [thread:$0]  %s1, 12288, %s27, [#allocation6], 768, 768, 48
    $region9: #{tpu_custom_call.1} parent=1 // pred_fallthru
      _
    // Predicated region
    $region10: #{tpu_custom_call.1} parent=1 // pred_check
      _
    $region11: #{tpu_custom_call.1} parent=1 // pred_check_branch
      %34 = sbr.rel (0) target = $region13
    $region12: #{tpu_custom_call.1} parent=1 // pred_region
      _
    $region13: #{tpu_custom_call.1} parent=1 // pred_fallthru
      _
    // Predicated region
    $region14: #{tpu_custom_call.1} parent=1 // pred_check
      _
    $region15: #{tpu_custom_call.1} parent=1 // pred_check_branch
      %36 = sbr.rel (0) target = $region17
    $region16: #{tpu_custom_call.1} parent=1 // pred_region
      %37 = dma.done [#allocation3], 192
    $region17: #{tpu_custom_call.1} parent=1 // pred_fallthru
      _
    // Predicated region
    $region18: #{tpu_custom_call.1} parent=1 // pred_check
      _
    $region19: #{tpu_custom_call.1} parent=1 // pred_check_branch
      %39 = sbr.rel (0) target = $region21
    $region20: #{tpu_custom_call.1} parent=1 // pred_region
      %40 = dma.done [#allocation6], 12288
    $region21: #{tpu_custom_call.1} parent=1 // pred_fallthru
      _
    %v41 = vld [vmem:[#allocation2] sm:$0xff]
    %v42 = vld [vmem:[#allocation2 + $0x8] sm:$0xf]
    %v43 = vld [vmem:[#allocation5] sm:$0xff]
    %v44 = vld [vmem:[#allocation5 + $0x8] sm:$0xff]
    %v45 = vld [vmem:[#allocation5 + $0x10] sm:$0xff]
    %v46 = vld [vmem:[#allocation5 + $0x18] sm:$0xff]
    %v47 = vld [vmem:[#allocation5 + $0x20] sm:$0xff]
    %v48 = vld [vmem:[#allocation5 + $0x28] sm:$0xff]
    %v49 = vld [vmem:[#allocation5 + $0x30] sm:$0xff]
    %v50 = vld [vmem:[#allocation5 + $0x38] sm:$0xff]
    %v51 = vld [vmem:[#allocation5 + $0x40] sm:$0xff]
    %v52 = vld [vmem:[#allocation5 + $0x48] sm:$0xff]
    %v53 = vld [vmem:[#allocation5 + $0x50] sm:$0xff]
    %v54 = vld [vmem:[#allocation5 + $0x58] sm:$0xff]
    %v55 = vld [vmem:[#allocation5 + $0x60] sm:$0xff]
    %v56 = vld [vmem:[#allocation5 + $0x68] sm:$0xff]
    %v57 = vld [vmem:[#allocation5 + $0x70] sm:$0xff]
    %v58 = vld [vmem:[#allocation5 + $0x78] sm:$0xff]
    %v59 = vld [vmem:[#allocation5 + $0x80] sm:$0xff]
    %v60 = vld [vmem:[#allocation5 + $0x88] sm:$0xff]
    %v61 = vld [vmem:[#allocation5 + $0x90] sm:$0xff]
    %v62 = vld [vmem:[#allocation5 + $0x98] sm:$0xff]
    %v63 = vld [vmem:[#allocation5 + $0xa0] sm:$0xff]
    %v64 = vld [vmem:[#allocation5 + $0xa8] sm:$0xff]
    %v65 = vld [vmem:[#allocation5 + $0xb0] sm:$0xff]
    %v66 = vld [vmem:[#allocation5 + $0xb8] sm:$0xff]
    %v67 = vld [vmem:[#allocation5 + $0xc0] sm:$0xff]
    %v68 = vld [vmem:[#allocation5 + $0xc8] sm:$0xff]
    %v69 = vld [vmem:[#allocation5 + $0xd0] sm:$0xff]
    %v70 = vld [vmem:[#allocation5 + $0xd8] sm:$0xff]
    %v71 = vld [vmem:[#allocation5 + $0xe0] sm:$0xff]
    %v72 = vld [vmem:[#allocation5 + $0xe8] sm:$0xff]
    %v73 = vld [vmem:[#allocation5 + $0xf0] sm:$0xff]
    %v74 = vld [vmem:[#allocation5 + $0xf8] sm:$0xff]
    %v75 = vld [vmem:[#allocation5 + $0x100] sm:$0xff]
    %v76 = vld [vmem:[#allocation5 + $0x108] sm:$0xff]
    %v77 = vld [vmem:[#allocation5 + $0x110] sm:$0xff]
    %v78 = vld [vmem:[#allocation5 + $0x118] sm:$0xff]
    %v79 = vld [vmem:[#allocation5 + $0x120] sm:$0xff]
    %v80 = vld [vmem:[#allocation5 + $0x128] sm:$0xff]
    %v81 = vld [vmem:[#allocation5 + $0x130] sm:$0xff]
    %v82 = vld [vmem:[#allocation5 + $0x138] sm:$0xff]
    %v83 = vld [vmem:[#allocation5 + $0x140] sm:$0xff]
    %v84 = vld [vmem:[#allocation5 + $0x148] sm:$0xff]
    %v85 = vld [vmem:[#allocation5 + $0x150] sm:$0xff]
    %v86 = vld [vmem:[#allocation5 + $0x158] sm:$0xff]
    %v87 = vld [vmem:[#allocation5 + $0x160] sm:$0xff]
    %v88 = vld [vmem:[#allocation5 + $0x168] sm:$0xff]
    %v89 = vld [vmem:[#allocation5 + $0x170] sm:$0xff]
    %v90 = vld [vmem:[#allocation5 + $0x178] sm:$0xff]
    %v91 = vld [vmem:[#allocation5 + $0x180] sm:$0xff]
    %v92 = vld [vmem:[#allocation5 + $0x188] sm:$0xff]
    %v93 = vld [vmem:[#allocation5 + $0x190] sm:$0xff]
    %v94 = vld [vmem:[#allocation5 + $0x198] sm:$0xff]
    %v95 = vld [vmem:[#allocation5 + $0x1a0] sm:$0xff]
    %v96 = vld [vmem:[#allocation5 + $0x1a8] sm:$0xff]
    %v97 = vld [vmem:[#allocation5 + $0x1b0] sm:$0xff]
    %v98 = vld [vmem:[#allocation5 + $0x1b8] sm:$0xff]
    %v99 = vld [vmem:[#allocation5 + $0x1c0] sm:$0xff]
    %v100 = vld [vmem:[#allocation5 + $0x1c8] sm:$0xff]
    %v101 = vld [vmem:[#allocation5 + $0x1d0] sm:$0xff]
    %v102 = vld [vmem:[#allocation5 + $0x1d8] sm:$0xff]
    %v103 = vld [vmem:[#allocation5 + $0x1e0] sm:$0xff]
    %v104 = vld [vmem:[#allocation5 + $0x1e8] sm:$0xff]
    %v105 = vld [vmem:[#allocation5 + $0x1f0] sm:$0xff]
    %v106 = vld [vmem:[#allocation5 + $0x1f8] sm:$0xff]
    %v107 = vld [vmem:[#allocation5 + $0x200] sm:$0xff]
    %v108 = vld [vmem:[#allocation5 + $0x208] sm:$0xff]
    %v109 = vld [vmem:[#allocation5 + $0x210] sm:$0xff]
    %v110 = vld [vmem:[#allocation5 + $0x218] sm:$0xff]
    %v111 = vld [vmem:[#allocation5 + $0x220] sm:$0xff]
    %v112 = vld [vmem:[#allocation5 + $0x228] sm:$0xff]
    %v113 = vld [vmem:[#allocation5 + $0x230] sm:$0xff]
    %v114 = vld [vmem:[#allocation5 + $0x238] sm:$0xff]
    %v115 = vld [vmem:[#allocation5 + $0x240] sm:$0xff]
    %v116 = vld [vmem:[#allocation5 + $0x248] sm:$0xff]
    %v117 = vld [vmem:[#allocation5 + $0x250] sm:$0xff]
    %v118 = vld [vmem:[#allocation5 + $0x258] sm:$0xff]
    %v119 = vld [vmem:[#allocation5 + $0x260] sm:$0xff]
    %v120 = vld [vmem:[#allocation5 + $0x268] sm:$0xff]
    %v121 = vld [vmem:[#allocation5 + $0x270] sm:$0xff]
    %v122 = vld [vmem:[#allocation5 + $0x278] sm:$0xff]
    %v123 = vld [vmem:[#allocation5 + $0x280] sm:$0xff]
    %v124 = vld [vmem:[#allocation5 + $0x288] sm:$0xff]
    %v125 = vld [vmem:[#allocation5 + $0x290] sm:$0xff]
    %v126 = vld [vmem:[#allocation5 + $0x298] sm:$0xff]
    %v127 = vld [vmem:[#allocation5 + $0x2a0] sm:$0xff]
    %v128 = vld [vmem:[#allocation5 + $0x2a8] sm:$0xff]
    %v129 = vld [vmem:[#allocation5 + $0x2b0] sm:$0xff]
    %v130 = vld [vmem:[#allocation5 + $0x2b8] sm:$0xff]
    %v131 = vld [vmem:[#allocation5 + $0x2c0] sm:$0xff]
    %v132 = vld [vmem:[#allocation5 + $0x2c8] sm:$0xff]
    %v133 = vld [vmem:[#allocation5 + $0x2d0] sm:$0xff]
    %v134 = vld [vmem:[#allocation5 + $0x2d8] sm:$0xff]
    %v135 = vld [vmem:[#allocation5 + $0x2e0] sm:$0xff]
    %v136 = vld [vmem:[#allocation5 + $0x2e8] sm:$0xff]
    %v137 = vld [vmem:[#allocation5 + $0x2f0] sm:$0xff]
    %v138 = vld [vmem:[#allocation5 + $0x2f8] sm:$0xff]
    %v139 = vld [vmem:[%s2] sm:$0x1]
    %v141 = vlaneseq
    %v142 = vshrl.u32 %v141, 7
    %v143 = vsub.s32 0, %v142
    %v144 = vrot.slane %v139, %v143
    %v148 = vcombine.high %v41, %v41
    %v150 = vunpack.c.l.s4 1983009808
    %v151 = vunpack.c.0.s8 %v150
    %v152 = vlaneseq
    %v153 = vshrl.u32 %v152, 7
    %v154 = vsub.s32 %v151, %v153
    %v155 = vrot.slane %v41, %v154
    %v157 = vunpack.c.l.s4 1983009808
    %v158 = vunpack.c.0.s8 %v157
    %v159 = vlaneseq
    %v160 = vshrl.u32 %v159, 7
    %v161 = vsub.s32 %v158, %v160
    %v162 = vrot.slane %v148, %v161
    %v163 = vcombine.high %v155, %v155
    %v164 = vcombine.high %v162, %v162
    %v166 = vunpack.c.l.s4 1983009808
    %v167 = vunpack.c.0.s8 %v166
    %v168 = vlaneseq
    %v169 = vshrl.u32 %v168, 7
    %v170 = vsub.s32 %v167, %v169
    %v171 = vrot.slane %v42, %v170
    %v172 = vcombine.high %v171, %v171
    %179 = vmatprep.subr.mxu0 %v44
    %180 = vmatpush1.xpose.msra.mxu0 %v43
    %181 = vmatprep.subr.mxu0 %v50
    %182 = vmatpush1.xpose.msra.mxu0 %v49
    %183 = vmatprep.subr.mxu0 %v56
    %184 = vmatpush1.xpose.msra.mxu0 %v55
    %185 = vmatprep.subr.mxu0 %v62
    %186 = vmatpush1.xpose.msra.mxu0 %v61
    %187 = vmatprep.subr.mxu0 %v68
    %188 = vmatpush1.xpose.msra.mxu0 %v67
    %189 = vmatprep.subr.mxu0 %v74
    %190 = vmatpush1.xpose.msra.mxu0 %v73
    %191 = vmatprep.subr.mxu0 %v80
    %192 = vmatpush1.xpose.msra.mxu0 %v79
    %193 = vmatprep.subr.mxu0 %v86
    %194 = vmatpush1.xpose.msra.mxu0 %v85
    %195 = vmatprep.subr.mxu0 %v92
    %196 = vmatpush1.xpose.msra.mxu0 %v91
    %197 = vmatprep.subr.mxu0 %v98
    %198 = vmatpush1.xpose.msra.mxu0 %v97
    %199 = vmatprep.subr.mxu0 %v104
    %200 = vmatpush1.xpose.msra.mxu0 %v103
    %201 = vmatprep.subr.mxu0 %v110
    %202 = vmatpush1.xpose.msra.mxu0 %v109
    %203 = vmatprep.subr.mxu0 %v116
    %204 = vmatpush1.xpose.msra.mxu0 %v115
    %205 = vmatprep.subr.mxu0 %v122
    %206 = vmatpush1.xpose.msra.mxu0 %v121
    %207 = vmatprep.subr.mxu0 %v128
    %208 = vmatpush1.xpose.msra.mxu0 %v127
    %209 = vmatprep.subr.mxu0 %v134
    %210 = vmatpush1.xpose.msra.mxu0 %v133
    %211 = vmatprep.subr.mxu0 0.0
    %212 = vmatpush1.xpose.msra.mxu0 0.0
    %213 = vmatprep.subr.mxu0 0.0
    %214 = vmatpush1.xpose.msra.mxu0 0.0
    %215 = vmatprep.subr.mxu0 0.0
    %216 = vmatpush1.xpose.msra.mxu0 0.0
    %217 = vmatprep.subr.mxu0 0.0
    %218 = vmatpush1.xpose.msra.mxu0 0.0
    %219 = vmatprep.subr.mxu0 0.0
    %220 = vmatpush1.xpose.msra.mxu0 0.0
    %221 = vmatprep.subr.mxu0 0.0
    %222 = vmatpush1.xpose.msra.mxu0 0.0
    %223 = vmatprep.subr.mxu0 0.0
    %224 = vmatpush1.xpose.msra.mxu0 0.0
    %225 = vmatprep.subr.mxu0 0.0
    %226 = vmatpush1.xpose.msra.mxu0 0.0
    %227 = vmatprep.subr.mxu0 0.0
    %228 = vmatpush1.xpose.msra.mxu0 0.0
    %229 = vmatprep.subr.mxu0 0.0
    %230 = vmatpush1.xpose.msra.mxu0 0.0
    %231 = vmatprep.subr.mxu0 0.0
    %232 = vmatpush1.xpose.msra.mxu0 0.0
    %233 = vmatprep.subr.mxu0 0.0
    %234 = vmatpush1.xpose.msra.mxu0 0.0
    %235 = vmatprep.subr.mxu0 0.0
    %236 = vmatpush1.xpose.msra.mxu0 0.0
    %237 = vmatprep.subr.mxu0 0.0
    %238 = vmatpush1.xpose.msra.mxu0 0.0
    %239 = vmatprep.subr.mxu0 0.0
    %240 = vmatpush1.xpose.msra.mxu0 0.0
    %241 = vmatprep.subr.mxu0 0.0
    %242 = vmatpush1.xpose.msra.mxu0 0.0
    %243 = vmatprep.mubr.f32.mxu0 %v163
    %244 = vmatmul.mubr.f32.gmra.mrb[0].mxu0 %v155
    %v245 = vpop.f32.mrb[0].mxu0
    %v246 = vadd.f32 %v144, %v245
    %v247 = vpop.f32.mrb[0].mxu0
    %248 = vdwg.mxu0
    %249 = vmatprep.subr.mxu0 %v46
    %250 = vmatpush1.xpose.msra.mxu0 %v45
    %251 = vmatprep.subr.mxu0 %v52
    %252 = vmatpush1.xpose.msra.mxu0 %v51
    %253 = vmatprep.subr.mxu0 %v58
    %254 = vmatpush1.xpose.msra.mxu0 %v57
    %255 = vmatprep.subr.mxu0 %v64
    %256 = vmatpush1.xpose.msra.mxu0 %v63
    %257 = vmatprep.subr.mxu0 %v70
    %258 = vmatpush1.xpose.msra.mxu0 %v69
    %259 = vmatprep.subr.mxu0 %v76
    %260 = vmatpush1.xpose.msra.mxu0 %v75
    %261 = vmatprep.subr.mxu0 %v82
    %262 = vmatpush1.xpose.msra.mxu0 %v81
    %263 = vmatprep.subr.mxu0 %v88
    %264 = vmatpush1.xpose.msra.mxu0 %v87
    %265 = vmatprep.subr.mxu0 %v94
    %266 = vmatpush1.xpose.msra.mxu0 %v93
    %267 = vmatprep.subr.mxu0 %v100
    %268 = vmatpush1.xpose.msra.mxu0 %v99
    %269 = vmatprep.subr.mxu0 %v106
    %270 = vmatpush1.xpose.msra.mxu0 %v105
    %271 = vmatprep.subr.mxu0 %v112
    %272 = vmatpush1.xpose.msra.mxu0 %v111
    %273 = vmatprep.subr.mxu0 %v118
    %274 = vmatpush1.xpose.msra.mxu0 %v117
    %275 = vmatprep.subr.mxu0 %v124
    %276 = vmatpush1.xpose.msra.mxu0 %v123
    %277 = vmatprep.subr.mxu0 %v130
    %278 = vmatpush1.xpose.msra.mxu0 %v129
    %279 = vmatprep.subr.mxu0 %v136
    %280 = vmatpush1.xpose.msra.mxu0 %v135
    %281 = vmatprep.subr.mxu0 0.0
    %282 = vmatpush1.xpose.msra.mxu0 0.0
    %283 = vmatprep.subr.mxu0 0.0
    %284 = vmatpush1.xpose.msra.mxu0 0.0
    %285 = vmatprep.subr.mxu0 0.0
    %286 = vmatpush1.xpose.msra.mxu0 0.0
    %287 = vmatprep.subr.mxu0 0.0
    %288 = vmatpush1.xpose.msra.mxu0 0.0
    %289 = vmatprep.subr.mxu0 0.0
    %290 = vmatpush1.xpose.msra.mxu0 0.0
    %291 = vmatprep.subr.mxu0 0.0
    %292 = vmatpush1.xpose.msra.mxu0 0.0
    %293 = vmatprep.subr.mxu0 0.0
    %294 = vmatpush1.xpose.msra.mxu0 0.0
    %295 = vmatprep.subr.mxu0 0.0
    %296 = vmatpush1.xpose.msra.mxu0 0.0
    %297 = vmatprep.subr.mxu0 0.0
    %298 = vmatpush1.xpose.msra.mxu0 0.0
    %299 = vmatprep.subr.mxu0 0.0
    %300 = vmatpush1.xpose.msra.mxu0 0.0
    %301 = vmatprep.subr.mxu0 0.0
    %302 = vmatpush1.xpose.msra.mxu0 0.0
    %303 = vmatprep.subr.mxu0 0.0
    %304 = vmatpush1.xpose.msra.mxu0 0.0
    %305 = vmatprep.subr.mxu0 0.0
    %306 = vmatpush1.xpose.msra.mxu0 0.0
    %307 = vmatprep.subr.mxu0 0.0
    %308 = vmatpush1.xpose.msra.mxu0 0.0
    %309 = vmatprep.subr.mxu0 0.0
    %310 = vmatpush1.xpose.msra.mxu0 0.0
    %311 = vmatprep.subr.mxu0 0.0
    %312 = vmatpush1.xpose.msra.mxu0 0.0
    %313 = vmatprep.mubr.f32.mxu0 %v164
    %314 = vmatmul.mubr.f32.gmra.mrb[0].mxu0 %v162
    %v315 = vpop.f32.mrb[0].mxu0
    %v316 = vadd.f32 %v246, %v315
    %v317 = vpop.f32.mrb[0].mxu0
    %318 = vdwg.mxu0
    %319 = vmatprep.subr.mxu0 %v48
    %320 = vmatpush1.xpose.msra.mxu0 %v47
    %321 = vmatprep.subr.mxu0 %v54
    %322 = vmatpush1.xpose.msra.mxu0 %v53
    %323 = vmatprep.subr.mxu0 %v60
    %324 = vmatpush1.xpose.msra.mxu0 %v59
    %325 = vmatprep.subr.mxu0 %v66
    %326 = vmatpush1.xpose.msra.mxu0 %v65
    %327 = vmatprep.subr.mxu0 %v72
    %328 = vmatpush1.xpose.msra.mxu0 %v71
    %329 = vmatprep.subr.mxu0 %v78
    %330 = vmatpush1.xpose.msra.mxu0 %v77
    %331 = vmatprep.subr.mxu0 %v84
    %332 = vmatpush1.xpose.msra.mxu0 %v83
    %333 = vmatprep.subr.mxu0 %v90
    %334 = vmatpush1.xpose.msra.mxu0 %v89
    %335 = vmatprep.subr.mxu0 %v96
    %336 = vmatpush1.xpose.msra.mxu0 %v95
    %337 = vmatprep.subr.mxu0 %v102
    %338 = vmatpush1.xpose.msra.mxu0 %v101
    %339 = vmatprep.subr.mxu0 %v108
    %340 = vmatpush1.xpose.msra.mxu0 %v107
    %341 = vmatprep.subr.mxu0 %v114
    %342 = vmatpush1.xpose.msra.mxu0 %v113
    %343 = vmatprep.subr.mxu0 %v120
    %344 = vmatpush1.xpose.msra.mxu0 %v119
    %345 = vmatprep.subr.mxu0 %v126
    %346 = vmatpush1.xpose.msra.mxu0 %v125
    %347 = vmatprep.subr.mxu0 %v132
    %348 = vmatpush1.xpose.msra.mxu0 %v131
    %349 = vmatprep.subr.mxu0 %v138
    %350 = vmatpush1.xpose.msra.mxu0 %v137
    %351 = vmatprep.subr.mxu0 0.0
    %352 = vmatpush1.xpose.msra.mxu0 0.0
    %353 = vmatprep.subr.mxu0 0.0
    %354 = vmatpush1.xpose.msra.mxu0 0.0
    %355 = vmatprep.subr.mxu0 0.0
    %356 = vmatpush1.xpose.msra.mxu0 0.0
    %357 = vmatprep.subr.mxu0 0.0
    %358 = vmatpush1.xpose.msra.mxu0 0.0
    %359 = vmatprep.subr.mxu0 0.0
    %360 = vmatpush1.xpose.msra.mxu0 0.0
    %361 = vmatprep.subr.mxu0 0.0
    %362 = vmatpush1.xpose.msra.mxu0 0.0
    %363 = vmatprep.subr.mxu0 0.0
    %364 = vmatpush1.xpose.msra.mxu0 0.0
    %365 = vmatprep.subr.mxu0 0.0
    %366 = vmatpush1.xpose.msra.mxu0 0.0
    %367 = vmatprep.subr.mxu0 0.0
    %368 = vmatpush1.xpose.msra.mxu0 0.0
    %369 = vmatprep.subr.mxu0 0.0
    %370 = vmatpush1.xpose.msra.mxu0 0.0
    %371 = vmatprep.subr.mxu0 0.0
    %372 = vmatpush1.xpose.msra.mxu0 0.0
    %373 = vmatprep.subr.mxu0 0.0
    %374 = vmatpush1.xpose.msra.mxu0 0.0
    %375 = vmatprep.subr.mxu0 0.0
    %376 = vmatpush1.xpose.msra.mxu0 0.0
    %377 = vmatprep.subr.mxu0 0.0
    %378 = vmatpush1.xpose.msra.mxu0 0.0
    %379 = vmatprep.subr.mxu0 0.0
    %380 = vmatpush1.xpose.msra.mxu0 0.0
    %381 = vmatprep.subr.mxu0 0.0
    %382 = vmatpush1.xpose.msra.mxu0 0.0
    %383 = vmatprep.mubr.f32.mxu0 %v172
    %384 = vmatmul.mubr.f32.gmra.mrb[0].mxu0 %v171
    %v385 = vpop.f32.mrb[0].mxu0
    %v386 = vadd.f32 %v316, %v385
    %v387 = vpop.f32.mrb[0].mxu0
    %388 = vdwg.mxu0
    %389 = vst [vmem:[#allocation7] sm:$0x3] %v386
    // Predicated region
    $region22: #{tpu_custom_call.1} parent=1 // pred_check
      _
    $region23: #{tpu_custom_call.1} parent=1 // pred_check_branch
      %391 = sbr.rel (0) target = $region25
    $region24: #{tpu_custom_call.1} parent=1 // pred_region
      %s393 = ssub.s32 32, 32
      %394 = vsyncadd [#allocation4], %s393
      %s396 = sshll.u32 [#allocation7], 4
      %s397 = int_to_ptr.vmem [resolvable:$true] %s396
      %399 = dma.vmem_to_hbm [thread:$0]  %s397, 32, %s3, [#allocation4]
    $region25: #{tpu_custom_call.1} parent=1 // pred_fallthru
      _
    // Predicated region
    $region26: #{tpu_custom_call.1} parent=1 // pred_check
      _
    $region27: #{tpu_custom_call.1} parent=1 // pred_check_branch
      %401 = sbr.rel (0) target = $region29
    $region28: #{tpu_custom_call.1} parent=1 // pred_region
      %402 = dma.done [#allocation4], 32
    $region29: #{tpu_custom_call.1} parent=1 // pred_fallthru
      _
    %403 = vsyncpa [#allocation3], 1
    %404 = vsyncpa [#allocation6], 1
    %405 = vsyncpa [#allocation4], 1

</llo_original>
